<compile_context>
chip_gen: v7x
topology: tpu7x:2x2x1
jax: 0.10.0
libtpu: 0.0.40
codegen_flags: <defaults>
</compile_context>

<pallas_src>
import jax
import jax.numpy as jnp
import numpy as np
from jax.experimental import pallas as pl
from jax.experimental.pallas import tpu as pltpu


def _round_up(x: int, m: int) -> int:
    return ((x + m - 1) // m) * m


def _vmem_budget_bytes() -> int:
    """Per-generation VMEM budget: ~70% of physical, capped at 96 MiB.

    v7x (64 MiB/TC) -> ~45 MiB; v5e/v6e (128 MiB) -> ~90 MiB.  Never assume
    128 MiB blindly; never trust the (16/32 MiB) scoped default either.
    """
    cap = 64 * 1024 * 1024                         # conservative fallback (v7x)
    try:
        info = pltpu.get_tpu_info()
        cap = int(getattr(info, "vmem_capacity_bytes", cap))
    except Exception:
        pass
    return max(16 * 1024 * 1024, min(int(cap * 0.70), 96 * 1024 * 1024))


# ----------------------------------------------------------------------------
# Kernels
# ----------------------------------------------------------------------------
def _logreg_kernel(x_ref, w_ref, b_ref, o_ref):
    # Single K step: MXU matmul with f32 accumulation, bias add rides in the
    # VPU slot, single cast to the output dtype (lane-dense store).
    acc = jnp.dot(x_ref[...], w_ref[...], preferred_element_type=jnp.float32)
    o_ref[...] = (acc + b_ref[...]).astype(o_ref.dtype)


def _logreg_kernel_kacc(x_ref, w_ref, b_ref, o_ref, acc_ref):
    # K-tiled reduction: f32 VMEM accumulator, init at k==0, bias add + store
    # only at the last K step (output block index is constant across k).
    k = pl.program_id(2)

    @pl.when(k == 0)
    def _():
        acc_ref[...] = jnp.zeros_like(acc_ref)

    acc_ref[...] += jnp.dot(x_ref[...], w_ref[...],
                            preferred_element_type=jnp.float32)

    @pl.when(k == pl.num_programs(2) - 1)
    def _():
        o_ref[...] = (acc_ref[...] + b_ref[...]).astype(o_ref.dtype)


# Memoized: does this jax build accept pl.Buffered(1) as a pipeline_mode?
_SINGLE_BUFFER_OK = None


def multiclass_logistic_regression(x, weight, bias, *,
                                   compute_dtype=jnp.bfloat16,
                                   tile_m: int = 512,
                                   tile_n: int = 512,
                                   tile_k: int = 512,
                                   force_k_grid: bool = False):
    """Forward of nn.Linear(in_features, num_classes) (the logistic-regression logits).

    x:      [B, F]   activations
    weight: [C, F]   (PyTorch nn.Linear layout)
    bias:   [C]
    returns [B, C] logits in x.dtype.
    """
    global _SINGLE_BUFFER_OK

    B, F = x.shape
    C = weight.shape[0]
    out_dtype = x.dtype

    # --- compute dtype (bf16 by default; None keeps x.dtype / exact path) ----
    cdtype = jnp.dtype(x.dtype) if compute_dtype is None else jnp.dtype(compute_dtype)
    # NOTE: if x arrives in f32 and is used exactly once, the wrapper cast is
    # an extra HBM pass; pipelines that keep activations in bf16 pay nothing.
    x_in = x.astype(cdtype)

    bx = cdtype.itemsize
    bw = cdtype.itemsize
    bo = jnp.dtype(out_dtype).itemsize
    sub = {4: 8, 2: 16, 1: 32}.get(bx, 8)          # sublane packing of compute dtype

    # --- class (lane) dimension: lane-dense, 256-aligned once it matters -----
    tile_n = max(128, int(tile_n))
    lane_align = 256 if C >= 256 else 128          # 256-wide MXU on v6e/v7x
    Cp = _round_up(max(C, 1), lane_align)
    if Cp <= tile_n:
        tn = Cp
    elif tile_n >= 512 and Cp % 512 == 0:
        tn = 512
    else:
        tn = 256                                   # Cp is a multiple of 256 here
    nc = Cp // tn

    # --- VMEM budget & K tiling ----------------------------------------------
    budget = _vmem_budget_bytes()
    tile_budget = int(budget * 0.85)               # headroom for Mosaic internals

    resident_w_bytes = F * tn * bw * (1 if nc == 1 else 2)
    if force_k_grid or resident_w_bytes > tile_budget // 2:
        tk = min(max(128, _round_up(int(tile_k), 128)), _round_up(F, 128))
        F_pad = _round_up(F, tk)                   # zero-padded K: reduction-safe
    else:
        tk, F_pad = F, F                           # whole-K weight stays resident
    nk = max(1, F_pad // tk)

    # --- batch tile (tm) ------------------------------------------------------
    w_resident = (nc == 1 and nk == 1)             # constant index_map
    b_resident = (nc == 1)
    n_w_buf = 1 if w_resident else 2               # Buffered(1) when resident
    n_b_buf = 1 if b_resident else 2
    fixed = tk * tn * bw * n_w_buf + tn * 4 * n_b_buf
    per_row = 2 * tk * bx + 2 * tn * bo + (tn * 4 if nk > 1 else 0)
    tm_cap = max(sub, ((tile_budget - fixed) // per_row // sub) * sub)

    B_pad = _round_up(B, sub)                      # pad only to the sublane
    tm = max(sub, min(_round_up(int(tile_m), sub), tm_cap, B_pad))
    if nc == 1 and B_pad >= 2 * sub:
        # Ensure >= 2 steps on the parallel batch axis so both v7x TCs work.
        tm = min(tm, _round_up(pl.cdiv(B_pad, 2), sub))
    tm = max(sub, (tm // sub) * sub)
    nb = pl.cdiv(B_pad, tm)                        # ragged last tile is masked

    # --- pad / lay out operands ----------------------------------------------
    if (B_pad, F_pad) != (B, F):
        x_in = jnp.pad(x_in, ((0, B_pad - B), (0, F_pad - F)))

    # Weight materialized once, directly in the [F_pad, Cp] MXU layout with
    # zero-padded class/K lanes (numerically inert).
    # TODO(synk): cache w_prep / b_prep across calls — it is an extra HBM pass
    # over the weight whenever this wrapper is not reused under one jit.
    w_prep = jnp.zeros((F_pad, Cp), dtype=cdtype).at[:F, :C].set(
        weight.T.astype(cdtype))
    b_prep = jnp.zeros((1, Cp), dtype=jnp.float32).at[:, :C].set(
        bias.astype(jnp.float32)[None, :])

    # --- grid / specs / call ---------------------------------------------------
    grid = (nb, nc, nk)
    kernel = _logreg_kernel if nk == 1 else _logreg_kernel_kacc
    scratch = [] if nk == 1 else [pltpu.VMEM((tm, tn), jnp.float32)]

    def make_specs(use_single_buffer):
        def maybe_single(shape, imap, resident):
            if use_single_buffer and resident:
                return pl.BlockSpec(shape, imap, pipeline_mode=pl.Buffered(1))
            return pl.BlockSpec(shape, imap)
        in_specs = [
            pl.BlockSpec((tm, tk), lambda i, j, k: (i, k)),            # stream x
            maybe_single((tk, tn), lambda i, j, k: (k, j), w_resident),  # weight
            maybe_single((1, tn), lambda i, j, k: (0, j), b_resident),   # bias
        ]
        out_specs = pl.BlockSpec((tm, tn), lambda i, j, k: (i, j))
        return in_specs, out_specs

    bytes_accessed = int(B_pad * F_pad * bx
                         + (1 if w_resident else nb) * F_pad * Cp * bw
                         + B_pad * Cp * bo + Cp * 4)
    cost = pl.CostEstimate(flops=2 * B_pad * F_pad * Cp,
                           transcendentals=0,
                           bytes_accessed=bytes_accessed)

    def run(use_single_buffer):
        in_specs, out_specs = make_specs(use_single_buffer)
        return pl.pallas_call(
            kernel,
            out_shape=jax.ShapeDtypeStruct((B_pad, Cp), out_dtype),
            grid_spec=pltpu.PrefetchScalarGridSpec(
                num_scalar_prefetch=0,
                grid=grid,
                in_specs=in_specs,
                out_specs=out_specs,
                scratch_shapes=scratch),
            compiler_params=pltpu.CompilerParams(
                dimension_semantics=("parallel", "parallel", "arbitrary"),
                vmem_limit_bytes=budget),
            cost_estimate=cost,
        )(x_in, w_prep, b_prep)

    want_single = w_resident or b_resident
    if want_single and _SINGLE_BUFFER_OK is not False:
        try:
            out_padded = run(True)
            _SINGLE_BUFFER_OK = True
        except Exception:
            _SINGLE_BUFFER_OK = False
            out_padded = run(False)
    else:
        out_padded = run(False)

    if B_pad == B and Cp == C:
        return out_padded                          # no post-kernel copy pass
    # TODO(synk): fuse the consumer (softmax / argmax / loss) into the kernel
    # epilogue instead of slicing the padded logits here.
    return out_padded[:B, :C]


if __name__ == "__main__":
    key = jax.random.PRNGKey(0)

    def make_inputs(k, B, F, C):
        kx, kw, kb = jax.random.split(k, 3)
        x = jax.random.normal(kx, (B, F), dtype=jnp.float32)
        bound = 1.0 / jnp.sqrt(jnp.float32(F))
        weight = jax.random.uniform(kw, (C, F), minval=-bound, maxval=bound,
                                    dtype=jnp.float32)
        bias = jax.random.uniform(kb, (C,), minval=-bound, maxval=bound,
                                  dtype=jnp.float32)
        return x, weight, bias

    def ref_fwd(x, w, b, cast_dtype=None):
        # float64 host reference (immune to TPU matmul precision modes).
        if cast_dtype is not None:
            x = jnp.asarray(x).astype(cast_dtype)
            w = jnp.asarray(w).astype(cast_dtype)
        xf = np.asarray(x, dtype=np.float64)
        wf = np.asarray(w, dtype=np.float64)
        return xf @ wf.T + np.asarray(b, dtype=np.float64)

    def check(out, ref, atol, rtol):
        assert np.allclose(np.asarray(out, dtype=np.float64), ref,
                           atol=atol, rtol=rtol)

    # 1) Module-sized shapes (batch=8, in_features=32, num_classes=4), exact
    #    f32 path.  Tolerance covers TPU f32-matmul multi-pass precision modes.
    x, w, b = make_inputs(key, B=8, F=32, C=4)
    out = multiclass_logistic_regression(x, w, b, compute_dtype=None)
    jax.block_until_ready(out)
    assert out.shape == (8, 4) and out.dtype == x.dtype
    check(out, ref_fwd(x, w, b), atol=5e-3, rtol=5e-3)

    # 2) Default bf16 compute path (f32 accumulation) on the same shapes.
    out_bf = multiclass_logistic_regression(x, w, b)
    jax.block_until_ready(out_bf)
    assert out_bf.shape == (8, 4)
    check(out_bf, ref_fwd(x, w, b, jnp.bfloat16), atol=2e-3, rtol=2e-3)
    check(out_bf, ref_fwd(x, w, b), atol=5e-2, rtol=5e-2)

    # 3) Ragged batch, multi-tile batch grid + megacore split, resident weight.
    k2 = jax.random.PRNGKey(1)
    x2, w2, b2 = make_inputs(k2, B=136, F=256, C=10)
    out2 = multiclass_logistic_regression(x2, w2, b2, tile_m=64)
    jax.block_until_ready(out2)
    assert out2.shape == (136, 10)
    check(out2, ref_fwd(x2, w2, b2, jnp.bfloat16), atol=5e-3, rtol=5e-3)

    # 4) K-reduction grid (f32 accumulator kernel) + class tiling, small shapes.
    k3 = jax.random.PRNGKey(2)
    x3, w3, b3 = make_inputs(k3, B=32, F=384, C=300)
    out3 = multiclass_logistic_regression(x3, w3, b3, tile_k=128, tile_n=256,
                                          force_k_grid=True)
    jax.block_until_ready(out3)
    assert out3.shape == (32, 300)
    check(out3, ref_fwd(x3, w3, b3, jnp.bfloat16), atol=8e-3, rtol=8e-3)

    print("KERNEL_OK")
</pallas_src>

<mosaic_0001>
module attributes {stable_mosaic.version = 11 : i64} {
  func.func @_logreg_kernel(%arg0: i32, %arg1: i32, %arg2: i32, %arg3: memref<8x32xf32, #tpu.memory_space<vmem>>, %arg4: memref<32x128xf32, #tpu.memory_space<vmem>>, %arg5: memref<1x128xf32, #tpu.memory_space<vmem>>, %arg6: memref<8x128xf32, #tpu.memory_space<vmem>>) attributes {dimension_semantics = [#tpu.dimension_semantics<parallel>, #tpu.dimension_semantics<parallel>, #tpu.dimension_semantics<arbitrary>], iteration_bounds = array<i64: 1, 1, 1>, scalar_prefetch = 0 : i64, scratch_operands = 0 : i64, tpu.core_type = #tpu.core_type<tc>, window_params = [{transform_indices = @transform_0, window_bounds = array<i64: 8, 32>}, {pipeline_mode = #tpu.pipeline_mode<synchronous>, transform_indices = @transform_1, window_bounds = array<i64: 32, 128>}, {pipeline_mode = #tpu.pipeline_mode<synchronous>, transform_indices = @transform_2, window_bounds = array<i64: 1, 128>}, {transform_indices = @transform_3, window_bounds = array<i64: 8, 128>}]} {
    %c0 = arith.constant 0 : index
    %c0_0 = arith.constant 0 : index
    %0 = vector.load %arg3[%c0, %c0_0] : memref<8x32xf32, #tpu.memory_space<vmem>>, vector<8x32xf32>
    %c0_1 = arith.constant 0 : index
    %c0_2 = arith.constant 0 : index
    %1 = vector.load %arg4[%c0_1, %c0_2] : memref<32x128xf32, #tpu.memory_space<vmem>>, vector<32x128xf32>
    %cst = arith.constant dense<0.000000e+00> : vector<8x128xf32>
    %2 = tpu.matmul %0, %1, %cst {dimension_numbers = #tpu.dot_dimension_numbers<[1], [0], [0], [1], [0, 0, 1, 1], [], []>} : vector<8x32xf32>, vector<32x128xf32>, vector<8x128xf32> -> vector<8x128xf32>
    %c0_3 = arith.constant 0 : index
    %c0_4 = arith.constant 0 : index
    %3 = vector.load %arg5[%c0_3, %c0_4] : memref<1x128xf32, #tpu.memory_space<vmem>>, vector<1x128xf32>
    %4 = vector.broadcast %3 : vector<1x128xf32> to vector<8x128xf32>
    %5 = arith.addf %2, %4 : vector<8x128xf32>
    %c0_5 = arith.constant 0 : index
    %c0_6 = arith.constant 0 : index
    %6 = vector.load %arg6[%c0_5, %c0_6] : memref<8x128xf32, #tpu.memory_space<vmem>>, vector<8x128xf32>
    tpu.vector_store %arg6[%c0_5, %c0_6], %5 {strides = array<i32>} : memref<8x128xf32, #tpu.memory_space<vmem>>, vector<8x128xf32>,
    return
  }
  func.func @transform_0(%arg0: i32, %arg1: i32, %arg2: i32) -> (i32, i32) {
    %c0_i32 = arith.constant 0 : i32
    return %arg0, %arg2 : i32, i32
  }
  func.func @transform_1(%arg0: i32, %arg1: i32, %arg2: i32) -> (i32, i32) {
    %c0_i32 = arith.constant 0 : i32
    return %arg2, %arg1 : i32, i32
  }
  func.func @transform_2(%arg0: i32, %arg1: i32, %arg2: i32) -> (i32, i32) {
    %c0_i32 = arith.constant 0 : i32
    %c0_i32_0 = arith.constant 0 : i32
    return %c0_i32, %arg1 : i32, i32
  }
  func.func @transform_3(%arg0: i32, %arg1: i32, %arg2: i32) -> (i32, i32) {
    %c0_i32 = arith.constant 0 : i32
    return %arg0, %arg1 : i32, i32
  }
}

module attributes {stable_mosaic.version = 11 : i64} {
  func.func @_logreg_kernel(%arg0: i32, %arg1: i32, %arg2: i32, %arg3: memref<8x32xf32, #tpu.memory_space<vmem>>, %arg4: memref<32x128xf32, #tpu.memory_space<vmem>>, %arg5: memref<1x128xf32, #tpu.memory_space<vmem>>, %arg6: memref<8x128xf32, #tpu.memory_space<vmem>>) attributes {dimension_semantics = [#tpu.dimension_semantics<parallel>, #tpu.dimension_semantics<parallel>, #tpu.dimension_semantics<arbitrary>], iteration_bounds = array<i64: 1, 1, 1>, scalar_prefetch = 0 : i64, scratch_operands = 0 : i64, tpu.core_type = #tpu.core_type<tc>, window_params = [{transform_indices = @transform_0, window_bounds = array<i64: 8, 32>}, {transform_indices = @transform_1, window_bounds = array<i64: 32, 128>}, {transform_indices = @transform_2, window_bounds = array<i64: 1, 128>}, {transform_indices = @transform_3, window_bounds = array<i64: 8, 128>}]} {
    %c0 = arith.constant 0 : index
    %c0_0 = arith.constant 0 : index
    %0 = vector.load %arg3[%c0, %c0_0] : memref<8x32xf32, #tpu.memory_space<vmem>>, vector<8x32xf32>
    %c0_1 = arith.constant 0 : index
    %c0_2 = arith.constant 0 : index
    %1 = vector.load %arg4[%c0_1, %c0_2] : memref<32x128xf32, #tpu.memory_space<vmem>>, vector<32x128xf32>
    %cst = arith.constant dense<0.000000e+00> : vector<8x128xf32>
    %2 = tpu.matmul %0, %1, %cst {dimension_numbers = #tpu.dot_dimension_numbers<[1], [0], [0], [1], [0, 0, 1, 1], [], []>} : vector<8x32xf32>, vector<32x128xf32>, vector<8x128xf32> -> vector<8x128xf32>
    %c0_3 = arith.constant 0 : index
    %c0_4 = arith.constant 0 : index
    %3 = vector.load %arg5[%c0_3, %c0_4] : memref<1x128xf32, #tpu.memory_space<vmem>>, vector<1x128xf32>
    %4 = vector.broadcast %3 : vector<1x128xf32> to vector<8x128xf32>
    %5 = arith.addf %2, %4 : vector<8x128xf32>
    %c0_5 = arith.constant 0 : index
    %c0_6 = arith.constant 0 : index
    %6 = vector.load %arg6[%c0_5, %c0_6] : memref<8x128xf32, #tpu.memory_space<vmem>>, vector<8x128xf32>
    tpu.vector_store %arg6[%c0_5, %c0_6], %5 {strides = array<i32>} : memref<8x128xf32, #tpu.memory_space<vmem>>, vector<8x128xf32>,
    return
  }
  func.func @transform_0(%arg0: i32, %arg1: i32, %arg2: i32) -> (i32, i32) {
    %c0_i32 = arith.constant 0 : i32
    return %arg0, %arg2 : i32, i32
  }
  func.func @transform_1(%arg0: i32, %arg1: i32, %arg2: i32) -> (i32, i32) {
    %c0_i32 = arith.constant 0 : i32
    return %arg2, %arg1 : i32, i32
  }
  func.func @transform_2(%arg0: i32, %arg1: i32, %arg2: i32) -> (i32, i32) {
    %c0_i32 = arith.constant 0 : i32
    %c0_i32_0 = arith.constant 0 : i32
    return %c0_i32, %arg1 : i32, i32
  }
  func.func @transform_3(%arg0: i32, %arg1: i32, %arg2: i32) -> (i32, i32) {
    %c0_i32 = arith.constant 0 : i32
    return %arg0, %arg1 : i32, i32
  }
}

</mosaic_0001>

<llo_original>
// kernel: tpu_custom_call.1
$region0: #{tpu_custom_call.1}
  #allocation0 [shape = 'u32[]', space=smem, size = 0x4, offset = 0x4, fixed_abs, tag = 'smem constant byte address 0x4 - core index']
  #allocation1 [shape = 'u32[144,128]{1,0:T(1,128)}', space=vmem, size = 0x12000, scoped, tag = 'internal scratch']
  %s0 = inlined_call_operand.hbm [shape: f32[8,32], index: 0, kind: input, shape index: {}]
  %s1 = inlined_call_operand.hbm [shape: f32[32,128], index: 1, kind: input, shape index: {}]
  %s2 = inlined_call_operand.vmem [shape: f32[1,128], index: 2, kind: input, shape index: {}]
  %s3 = inlined_call_operand.hbm [shape: f32[8,128], index: 3, kind: output, shape index: {}]
  %s4 = sld [smem:[#allocation0]]
  $region30: #{tpu_custom_call.1} parent=0
    _
  %s6 = ssub.s32 1, %s4
  %s7 = scalar_select 0, %s6, %s4
  $region1: #{tpu_custom_call.1} parent=0
    #allocation2 [shape = 'u8[4096]{0}', space=vmem, size = 0x1000, scoped, tag = 'input window, operand 0, single buffered']
    #allocation3 [shape = 's32[1]{0}', space=sflag, size = 0x4, scoped, tag = 'scoped memory for tpu_custom_call.1']
    #allocation4 [shape = 's32[1]{0}', space=sflag, size = 0x4, scoped, tag = 'scoped memory for tpu_custom_call.1']
    #allocation5 [shape = 'u8[16384]{0}', space=vmem, size = 0x4000, scoped, tag = 'input window, operand 1, single buffered']
    #allocation6 [shape = 's32[1]{0}', space=sflag, size = 0x4, scoped, tag = 'scoped memory for tpu_custom_call.1']
    #allocation7 [shape = 'u8[4096]{0}', space=vmem, size = 0x1000, scoped, tag = 'output window, operand 0, single buffered']
    %8 = vsyncpa [#allocation3], 0
    %9 = vsyncpa [#allocation6], 0
    %10 = vsyncpa [#allocation4], 0
    // Predicated region
    $region2: #{tpu_custom_call.1} parent=1 // pred_check
      _
    $region3: #{tpu_custom_call.1} parent=1 // pred_check_branch
      %12 = sbr.rel (0) target = $region5
    $region4: #{tpu_custom_call.1} parent=1 // pred_region
      %s14 = ssub.s32 128, 128
      %15 = vsyncadd [#allocation3], %s14
      %s17 = sshll.u32 [#allocation2], 4
      %s18 = int_to_ptr.vmem [resolvable:$true] %s17
      %20 = dma.hbm_to_vmem [thread:$0]  %s0, 128, %s18, [#allocation3]
    $region5: #{tpu_custom_call.1} parent=1 // pred_fallthru
      _
    // Predicated region
    $region6: #{tpu_custom_call.1} parent=1 // pred_check
      _
    $region7: #{tpu_custom_call.1} parent=1 // pred_check_branch
      %22 = sbr.rel (0) target = $region9
    $region8: #{tpu_custom_call.1} parent=1 // pred_region
      %s24 = ssub.s32 512, 512
      %25 = vsyncadd [#allocation6], %s24
      %s26 = sshll.u32 [#allocation5], 4
      %s27 = int_to_ptr.vmem [resolvable:$true] %s26
      %32 = dma.hbm_to_vmem [thread:$0]  %s1, 512, %s27, [#allocation6], 128, 128, 8
    $region9: #{tpu_custom_call.1} parent=1 // pred_fallthru
      _
    // Predicated region
    $region10: #{tpu_custom_call.1} parent=1 // pred_check
      _
    $region11: #{tpu_custom_call.1} parent=1 // pred_check_branch
      %34 = sbr.rel (0) target = $region13
    $region12: #{tpu_custom_call.1} parent=1 // pred_region
      _
    $region13: #{tpu_custom_call.1} parent=1 // pred_fallthru
      _
    // Predicated region
    $region14: #{tpu_custom_call.1} parent=1 // pred_check
      _
    $region15: #{tpu_custom_call.1} parent=1 // pred_check_branch
      %36 = sbr.rel (0) target = $region17
    $region16: #{tpu_custom_call.1} parent=1 // pred_region
      %37 = dma.done [#allocation3], 128
    $region17: #{tpu_custom_call.1} parent=1 // pred_fallthru
      _
    // Predicated region
    $region18: #{tpu_custom_call.1} parent=1 // pred_check
      _
    $region19: #{tpu_custom_call.1} parent=1 // pred_check_branch
      %39 = sbr.rel (0) target = $region21
    $region20: #{tpu_custom_call.1} parent=1 // pred_region
      %40 = dma.done [#allocation6], 512
    $region21: #{tpu_custom_call.1} parent=1 // pred_fallthru
      _
    %v41 = vld [vmem:[#allocation2] sm:$0xff]
    %v42 = vld [vmem:[#allocation5] sm:$0xff]
    %v43 = vld [vmem:[#allocation5 + $0x8] sm:$0xff]
    %v44 = vld [vmem:[#allocation5 + $0x10] sm:$0xff]
    %v45 = vld [vmem:[#allocation5 + $0x18] sm:$0xff]
    %v46 = vld [vmem:[%s2] sm:$0x1]
    %v48 = vlaneseq
    %v49 = vshrl.u32 %v48, 7
    %v50 = vsub.s32 0, %v49
    %v51 = vrot.slane %v46, %v50
    %vm53 = vcmask 261120
    %v55 = vsel %vm53, %v41, 0
    %57 = vmatprep.subr.mxu0 0.0
    %58 = vmatpush1.msra.mxu0 %v42
    %59 = vmatprep.subr.mxu0 0.0
    %60 = vmatpush1.msra.mxu0 %v43
    %61 = vmatprep.subr.mxu0 0.0
    %62 = vmatpush1.msra.mxu0 %v44
    %63 = vmatprep.subr.mxu0 0.0
    %64 = vmatpush1.msra.mxu0 %v45
    %65 = vmatprep.subr.mxu0 0.0
    %66 = vmatpush1.msra.mxu0 0.0
    %67 = vmatprep.subr.mxu0 0.0
    %68 = vmatpush1.msra.mxu0 0.0
    %69 = vmatprep.subr.mxu0 0.0
    %70 = vmatpush1.msra.mxu0 0.0
    %71 = vmatprep.subr.mxu0 0.0
    %72 = vmatpush1.msra.mxu0 0.0
    %73 = vmatprep.subr.mxu0 0.0
    %74 = vmatpush1.msra.mxu0 0.0
    %75 = vmatprep.subr.mxu0 0.0
    %76 = vmatpush1.msra.mxu0 0.0
    %77 = vmatprep.subr.mxu0 0.0
    %78 = vmatpush1.msra.mxu0 0.0
    %79 = vmatprep.subr.mxu0 0.0
    %80 = vmatpush1.msra.mxu0 0.0
    %81 = vmatprep.subr.mxu0 0.0
    %82 = vmatpush1.msra.mxu0 0.0
    %83 = vmatprep.subr.mxu0 0.0
    %84 = vmatpush1.msra.mxu0 0.0
    %85 = vmatprep.subr.mxu0 0.0
    %86 = vmatpush1.msra.mxu0 0.0
    %87 = vmatprep.subr.mxu0 0.0
    %88 = vmatpush1.msra.mxu0 0.0
    %89 = vmatprep.subr.mxu0 0.0
    %90 = vmatpush1.msra.mxu0 0.0
    %91 = vmatprep.subr.mxu0 0.0
    %92 = vmatpush1.msra.mxu0 0.0
    %93 = vmatprep.subr.mxu0 0.0
    %94 = vmatpush1.msra.mxu0 0.0
    %95 = vmatprep.subr.mxu0 0.0
    %96 = vmatpush1.msra.mxu0 0.0
    %97 = vmatprep.subr.mxu0 0.0
    %98 = vmatpush1.msra.mxu0 0.0
    %99 = vmatprep.subr.mxu0 0.0
    %100 = vmatpush1.msra.mxu0 0.0
    %101 = vmatprep.subr.mxu0 0.0
    %102 = vmatpush1.msra.mxu0 0.0
    %103 = vmatprep.subr.mxu0 0.0
    %104 = vmatpush1.msra.mxu0 0.0
    %105 = vmatprep.subr.mxu0 0.0
    %106 = vmatpush1.msra.mxu0 0.0
    %107 = vmatprep.subr.mxu0 0.0
    %108 = vmatpush1.msra.mxu0 0.0
    %109 = vmatprep.subr.mxu0 0.0
    %110 = vmatpush1.msra.mxu0 0.0
    %111 = vmatprep.subr.mxu0 0.0
    %112 = vmatpush1.msra.mxu0 0.0
    %113 = vmatprep.subr.mxu0 0.0
    %114 = vmatpush1.msra.mxu0 0.0
    %115 = vmatprep.subr.mxu0 0.0
    %116 = vmatpush1.msra.mxu0 0.0
    %117 = vmatprep.subr.mxu0 0.0
    %118 = vmatpush1.msra.mxu0 0.0
    %119 = vmatprep.subr.mxu0 0.0
    %120 = vmatpush1.msra.mxu0 0.0
    %121 = vmatprep.mubr.f32.mxu0 0.0
    %122 = vmatmul.mubr.f32.gmra.mrb[0].mxu0 %v55
    %v123 = vpop.f32.mrb[0].mxu0
    %v124 = vadd.f32 %v51, %v123
    %v125 = vpop.f32.mrb[0].mxu0
    %126 = vdwg.mxu0
    %127 = vst [vmem:[#allocation7] sm:$0xff] %v124
    // Predicated region
    $region22: #{tpu_custom_call.1} parent=1 // pred_check
      _
    $region23: #{tpu_custom_call.1} parent=1 // pred_check_branch
      %129 = sbr.rel (0) target = $region25
    $region24: #{tpu_custom_call.1} parent=1 // pred_region
      %s131 = ssub.s32 128, 128
      %132 = vsyncadd [#allocation4], %s131
      %s134 = sshll.u32 [#allocation7], 4
      %s135 = int_to_ptr.vmem [resolvable:$true] %s134
      %137 = dma.vmem_to_hbm [thread:$0]  %s135, 128, %s3, [#allocation4]
    $region25: #{tpu_custom_call.1} parent=1 // pred_fallthru
      _
    // Predicated region
    $region26: #{tpu_custom_call.1} parent=1 // pred_check
      _
    $region27: #{tpu_custom_call.1} parent=1 // pred_check_branch
      %139 = sbr.rel (0) target = $region29
    $region28: #{tpu_custom_call.1} parent=1 // pred_region
      %140 = dma.done [#allocation4], 128
    $region29: #{tpu_custom_call.1} parent=1 // pred_fallthru
      _
    %141 = vsyncpa [#allocation3], 1
    %142 = vsyncpa [#allocation6], 1
    %143 = vsyncpa [#allocation4], 1

// kernel: tpu_custom_call.1
$region0: #{tpu_custom_call.1}
  #allocation0 [shape = 'u32[]', space=smem, size = 0x4, offset = 0x4, fixed_abs, tag = 'smem constant byte address 0x4 - core index']
  #allocation1 [shape = 'u32[144,128]{1,0:T(1,128)}', space=vmem, size = 0x12000, scoped, tag = 'internal scratch']
  %s0 = inlined_call_operand.hbm [shape: f32[8,32], index: 0, kind: input, shape index: {}]
  %s1 = inlined_call_operand.hbm [shape: f32[32,128], index: 1, kind: input, shape index: {}]
  %s2 = inlined_call_operand.vmem [shape: f32[1,128], index: 2, kind: input, shape index: {}]
  %s3 = inlined_call_operand.hbm [shape: f32[8,128], index: 3, kind: output, shape index: {}]
  %s4 = sld [smem:[#allocation0]]
  $region30: #{tpu_custom_call.1} parent=0
    _
  %s6 = ssub.s32 1, %s4
  %s7 = scalar_select 0, %s6, %s4
  $region1: #{tpu_custom_call.1} parent=0
    #allocation2 [shape = 'u8[4096]{0}', space=vmem, size = 0x1000, scoped, tag = 'input window, operand 0, single buffered']
    #allocation3 [shape = 's32[1]{0}', space=sflag, size = 0x4, scoped, tag = 'scoped memory for tpu_custom_call.1']
    #allocation4 [shape = 's32[1]{0}', space=sflag, size = 0x4, scoped, tag = 'scoped memory for tpu_custom_call.1']
    #allocation5 [shape = 'u8[16384]{0}', space=vmem, size = 0x4000, scoped, tag = 'input window, operand 1, single buffered']
    #allocation6 [shape = 's32[1]{0}', space=sflag, size = 0x4, scoped, tag = 'scoped memory for tpu_custom_call.1']
    #allocation7 [shape = 'u8[4096]{0}', space=vmem, size = 0x1000, scoped, tag = 'output window, operand 0, single buffered']
    %8 = vsyncpa [#allocation3], 0
    %9 = vsyncpa [#allocation6], 0
    %10 = vsyncpa [#allocation4], 0
    // Predicated region
    $region2: #{tpu_custom_call.1} parent=1 // pred_check
      _
    $region3: #{tpu_custom_call.1} parent=1 // pred_check_branch
      %12 = sbr.rel (0) target = $region5
    $region4: #{tpu_custom_call.1} parent=1 // pred_region
      %s14 = ssub.s32 128, 128
      %15 = vsyncadd [#allocation3], %s14
      %s17 = sshll.u32 [#allocation2], 4
      %s18 = int_to_ptr.vmem [resolvable:$true] %s17
      %20 = dma.hbm_to_vmem [thread:$0]  %s0, 128, %s18, [#allocation3]
    $region5: #{tpu_custom_call.1} parent=1 // pred_fallthru
      _
    // Predicated region
    $region6: #{tpu_custom_call.1} parent=1 // pred_check
      _
    $region7: #{tpu_custom_call.1} parent=1 // pred_check_branch
      %22 = sbr.rel (0) target = $region9
    $region8: #{tpu_custom_call.1} parent=1 // pred_region
      %s24 = ssub.s32 512, 512
      %25 = vsyncadd [#allocation6], %s24
      %s26 = sshll.u32 [#allocation5], 4
      %s27 = int_to_ptr.vmem [resolvable:$true] %s26
      %32 = dma.hbm_to_vmem [thread:$0]  %s1, 512, %s27, [#allocation6], 128, 128, 8
    $region9: #{tpu_custom_call.1} parent=1 // pred_fallthru
      _
    // Predicated region
    $region10: #{tpu_custom_call.1} parent=1 // pred_check
      _
    $region11: #{tpu_custom_call.1} parent=1 // pred_check_branch
      %34 = sbr.rel (0) target = $region13
    $region12: #{tpu_custom_call.1} parent=1 // pred_region
      _
    $region13: #{tpu_custom_call.1} parent=1 // pred_fallthru
      _
    // Predicated region
    $region14: #{tpu_custom_call.1} parent=1 // pred_check
      _
    $region15: #{tpu_custom_call.1} parent=1 // pred_check_branch
      %36 = sbr.rel (0) target = $region17
    $region16: #{tpu_custom_call.1} parent=1 // pred_region
      %37 = dma.done [#allocation3], 128
    $region17: #{tpu_custom_call.1} parent=1 // pred_fallthru
      _
    // Predicated region
    $region18: #{tpu_custom_call.1} parent=1 // pred_check
      _
    $region19: #{tpu_custom_call.1} parent=1 // pred_check_branch
      %39 = sbr.rel (0) target = $region21
    $region20: #{tpu_custom_call.1} parent=1 // pred_region
      %40 = dma.done [#allocation6], 512
    $region21: #{tpu_custom_call.1} parent=1 // pred_fallthru
      _
    %v41 = vld [vmem:[#allocation2] sm:$0xff]
    %v42 = vld [vmem:[#allocation5] sm:$0xff]
    %v43 = vld [vmem:[#allocation5 + $0x8] sm:$0xff]
    %v44 = vld [vmem:[#allocation5 + $0x10] sm:$0xff]
    %v45 = vld [vmem:[#allocation5 + $0x18] sm:$0xff]
    %v46 = vld [vmem:[%s2] sm:$0x1]
    %v48 = vlaneseq
    %v49 = vshrl.u32 %v48, 7
    %v50 = vsub.s32 0, %v49
    %v51 = vrot.slane %v46, %v50
    %vm53 = vcmask 261120
    %v55 = vsel %vm53, %v41, 0
    %57 = vmatprep.subr.mxu0 0.0
    %58 = vmatpush1.msra.mxu0 %v42
    %59 = vmatprep.subr.mxu0 0.0
    %60 = vmatpush1.msra.mxu0 %v43
    %61 = vmatprep.subr.mxu0 0.0
    %62 = vmatpush1.msra.mxu0 %v44
    %63 = vmatprep.subr.mxu0 0.0
    %64 = vmatpush1.msra.mxu0 %v45
    %65 = vmatprep.subr.mxu0 0.0
    %66 = vmatpush1.msra.mxu0 0.0
    %67 = vmatprep.subr.mxu0 0.0
    %68 = vmatpush1.msra.mxu0 0.0
    %69 = vmatprep.subr.mxu0 0.0
    %70 = vmatpush1.msra.mxu0 0.0
    %71 = vmatprep.subr.mxu0 0.0
    %72 = vmatpush1.msra.mxu0 0.0
    %73 = vmatprep.subr.mxu0 0.0
    %74 = vmatpush1.msra.mxu0 0.0
    %75 = vmatprep.subr.mxu0 0.0
    %76 = vmatpush1.msra.mxu0 0.0
    %77 = vmatprep.subr.mxu0 0.0
    %78 = vmatpush1.msra.mxu0 0.0
    %79 = vmatprep.subr.mxu0 0.0
    %80 = vmatpush1.msra.mxu0 0.0
    %81 = vmatprep.subr.mxu0 0.0
    %82 = vmatpush1.msra.mxu0 0.0
    %83 = vmatprep.subr.mxu0 0.0
    %84 = vmatpush1.msra.mxu0 0.0
    %85 = vmatprep.subr.mxu0 0.0
    %86 = vmatpush1.msra.mxu0 0.0
    %87 = vmatprep.subr.mxu0 0.0
    %88 = vmatpush1.msra.mxu0 0.0
    %89 = vmatprep.subr.mxu0 0.0
    %90 = vmatpush1.msra.mxu0 0.0
    %91 = vmatprep.subr.mxu0 0.0
    %92 = vmatpush1.msra.mxu0 0.0
    %93 = vmatprep.subr.mxu0 0.0
    %94 = vmatpush1.msra.mxu0 0.0
    %95 = vmatprep.subr.mxu0 0.0
    %96 = vmatpush1.msra.mxu0 0.0
    %97 = vmatprep.subr.mxu0 0.0
    %98 = vmatpush1.msra.mxu0 0.0
    %99 = vmatprep.subr.mxu0 0.0
    %100 = vmatpush1.msra.mxu0 0.0
    %101 = vmatprep.subr.mxu0 0.0
    %102 = vmatpush1.msra.mxu0 0.0
    %103 = vmatprep.subr.mxu0 0.0
    %104 = vmatpush1.msra.mxu0 0.0
    %105 = vmatprep.subr.mxu0 0.0
    %106 = vmatpush1.msra.mxu0 0.0
    %107 = vmatprep.subr.mxu0 0.0
    %108 = vmatpush1.msra.mxu0 0.0
    %109 = vmatprep.subr.mxu0 0.0
    %110 = vmatpush1.msra.mxu0 0.0
    %111 = vmatprep.subr.mxu0 0.0
    %112 = vmatpush1.msra.mxu0 0.0
    %113 = vmatprep.subr.mxu0 0.0
    %114 = vmatpush1.msra.mxu0 0.0
    %115 = vmatprep.subr.mxu0 0.0
    %116 = vmatpush1.msra.mxu0 0.0
    %117 = vmatprep.subr.mxu0 0.0
    %118 = vmatpush1.msra.mxu0 0.0
    %119 = vmatprep.subr.mxu0 0.0
    %120 = vmatpush1.msra.mxu0 0.0
    %121 = vmatprep.mubr.f32.mxu0 0.0
    %122 = vmatmul.mubr.f32.gmra.mrb[0].mxu0 %v55
    %v123 = vpop.f32.mrb[0].mxu0
    %v124 = vadd.f32 %v51, %v123
    %v125 = vpop.f32.mrb[0].mxu0
    %126 = vdwg.mxu0
    %127 = vst [vmem:[#allocation7] sm:$0xff] %v124
    // Predicated region
    $region22: #{tpu_custom_call.1} parent=1 // pred_check
      _
    $region23: #{tpu_custom_call.1} parent=1 // pred_check_branch
      %129 = sbr.rel (0) target = $region25
    $region24: #{tpu_custom_call.1} parent=1 // pred_region
      %s131 = ssub.s32 128, 128
      %132 = vsyncadd [#allocation4], %s131
      %s134 = sshll.u32 [#allocation7], 4
      %s135 = int_to_ptr.vmem [resolvable:$true] %s134
      %137 = dma.vmem_to_hbm [thread:$0]  %s135, 128, %s3, [#allocation4]
    $region25: #{tpu_custom_call.1} parent=1 // pred_fallthru
      _
    // Predicated region
    $region26: #{tpu_custom_call.1} parent=1 // pred_check
      _
    $region27: #{tpu_custom_call.1} parent=1 // pred_check_branch
      %139 = sbr.rel (0) target = $region29
    $region28: #{tpu_custom_call.1} parent=1 // pred_region
      %140 = dma.done [#allocation4], 128
    $region29: #{tpu_custom_call.1} parent=1 // pred_fallthru
      _
    %141 = vsyncpa [#allocation3], 1
    %142 = vsyncpa [#allocation6], 1
    %143 = vsyncpa [#allocation4], 1

</llo_original>
